<compile_context>
chip_gen: v5e
topology: v5e:2x2
jax: 0.10.0
libtpu: 0.0.40
codegen_flags: <defaults>
</compile_context>

<pallas_src>
import dataclasses
import math

import jax
import jax.numpy as jnp
from jax import lax
from jax.experimental import pallas as pl
from jax.experimental.pallas import tpu as pltpu


_LANES = 128
_SUBLANES = 8
_TARGET_BLOCK_BYTES = 4 * 1024 * 1024   # ~4 MiB per-step DMA block
_MAX_POST_LANES = 8192                  # caps lane-fold unroll at 64 slabs
_MAX_PRE_TILE = 512                     # caps in-kernel pre-dim reduce depth
_CHUNKS_PER_TILE = 32                   # per-tensor fold unroll bound
_VMEM_LIMIT = 32 * 1024 * 1024          # safe on v5e/v6e/v7x


def _cdiv(a: int, b: int) -> int:
    return -(-a // b)


def _round_up(a: int, m: int) -> int:
    return _cdiv(a, m) * m


def _detect_chip():
    try:
        kind = jax.devices()[0].device_kind.lower()
    except Exception:
        kind = ""
    n_cores = 2 if "v7" in kind else 1               # v7x: 2 TCs / chip
    has_bf16_vpu = ("v6" in kind) or ("v7" in kind)  # v5e has no bf16 VALU
    return n_cores, has_bf16_vpu


_N_CORES, _HAS_BF16_VPU = _detect_chip()
_LEAD_SEM = pltpu.CORE_PARALLEL if _N_CORES > 1 else pltpu.ARBITRARY


def _acc_dtype(dtype):
    dtype = jnp.dtype(dtype)
    if dtype == jnp.float32:
        return jnp.float32
    if dtype == jnp.bfloat16 and _HAS_BF16_VPU:
        return jnp.bfloat16   # min/max is a pure selection — exact in bf16
    return jnp.float32        # ints / f16 / v5e-bf16: widen to f32


# ----------------------------------------------------------------------------
# QScheme (mirrors the qscheme object the PyTorch forward asserts on)
# ----------------------------------------------------------------------------
@dataclasses.dataclass(frozen=True)
class QScheme:
    per_channel: bool = False
    ch_axis: int = 1  # channel axis in NCHW


# ----------------------------------------------------------------------------
# Per-tensor min/max
# ----------------------------------------------------------------------------
def per_tensor_minmax(x: jax.Array):
    total = int(x.size)
    acc_dt = _acc_dtype(x.dtype)
    if total == 0:
        return jnp.array(jnp.inf, acc_dt), jnp.array(-jnp.inf, acc_dt)

    x_flat = x.reshape(-1)
    aligned = (total // _LANES) * _LANES
    if aligned == 0:                       # tiny tensor: plain XLA reduce
        v = x_flat.astype(acc_dt)
        return jnp.min(v), jnp.max(v)

    rows = aligned // _LANES
    if aligned == total:
        x2d = x_flat.reshape(rows, _LANES)            # free reshape, no copy
    else:
        # One prefix copy (cheaper than the old full edge-pad); the <128-elem
        # tail is reduced by XLA below.
        x2d = x_flat[:aligned].reshape(rows, _LANES)

    itemsize = jnp.dtype(x.dtype).itemsize
    target_rows = max(_SUBLANES,
                      (_TARGET_BLOCK_BYTES // (_LANES * itemsize))
                      // _SUBLANES * _SUBLANES)       # ~4 MiB / block
    tile_rows = rows if rows <= target_rows else target_rows
    total_tiles = _cdiv(rows, tile_rows)
    per_core = _cdiv(total_tiles, _N_CORES)
    ragged = total_tiles * tile_rows != rows          # only last tile overruns

    # Small fixed resident accumulator, independent of tile_rows.
    acc_rows = _round_up(max(_SUBLANES, _cdiv(tile_rows, _CHUNKS_PER_TILE)),
                         _SUBLANES)
    acc_rows = min(acc_rows, _round_up(tile_rows, _SUBLANES))
    n_chunks = _cdiv(tile_rows, acc_rows)

    def kernel(x_ref, min_ref, max_ref):
        c = pl.program_id(0)
        i = pl.program_id(1)

        @pl.when(i == 0)
        def _():
            min_ref[...] = jnp.full(min_ref.shape, jnp.inf, min_ref.dtype)
            max_ref[...] = jnp.full(max_ref.shape, -jnp.inf, max_ref.dtype)

        # Clamp: core 1 may re-process the last tile when total_tiles is odd
        # — harmless for idempotent min/max.
        gtile = jnp.minimum(c * per_core + i, total_tiles - 1)
        xt = x_ref[...].astype(acc_dt)                # (tile_rows, 128)

        def fold(mask_rows):
            # Pure elementwise VPU folds into the small resident accumulator.
            base_row = gtile * tile_rows
            for ci in range(n_chunks):
                r0 = ci * acc_rows
                s = min(acc_rows, tile_rows - r0)
                chunk = xt[r0:r0 + s]
                if mask_rows:
                    row = base_row + r0 + lax.broadcasted_iota(
                        jnp.int32, (s, _LANES), 0)
                    valid = row < rows
                    cmin = jnp.where(valid, chunk, jnp.inf)
                    cmax = jnp.where(valid, chunk, -jnp.inf)
                else:
                    cmin = chunk
                    cmax = chunk
                min_ref[0:s] = jnp.minimum(min_ref[0:s], cmin)
                max_ref[0:s] = jnp.maximum(max_ref[0:s], cmax)

        if ragged:
            is_edge = gtile == total_tiles - 1
            @pl.when(is_edge)
            def _():
                fold(True)
            @pl.when(jnp.logical_not(is_edge))
            def _():
                fold(False)
        else:
            fold(False)

    min_out, max_out = pl.pallas_call(
        kernel,
        out_shape=(
            jax.ShapeDtypeStruct((_N_CORES * acc_rows, _LANES), acc_dt),
            jax.ShapeDtypeStruct((_N_CORES * acc_rows, _LANES), acc_dt),
        ),
        grid_spec=pltpu.PrefetchScalarGridSpec(
            num_scalar_prefetch=0,
            grid=(_N_CORES, per_core),
            in_specs=[pl.BlockSpec(
                (tile_rows, _LANES),
                lambda c, i: (jnp.minimum(c * per_core + i, total_tiles - 1),
                              0))],
            out_specs=(
                pl.BlockSpec((acc_rows, _LANES), lambda c, i: (c, 0)),
                pl.BlockSpec((acc_rows, _LANES), lambda c, i: (c, 0)),
            ),
        ),
        compiler_params=pltpu.CompilerParams(
            dimension_semantics=(_LEAD_SEM, pltpu.ARBITRARY),
            vmem_limit_bytes=_VMEM_LIMIT),
    )(x2d)

    # Tiny final reduction (a few KiB) + the <128-element tail.
    mn = jnp.min(min_out)
    mx = jnp.max(max_out)
    if aligned != total:
        tail = x_flat[aligned:].astype(acc_dt)
        mn = jnp.minimum(mn, jnp.min(tail))
        mx = jnp.maximum(mx, jnp.max(tail))
    return mn, mx


# ----------------------------------------------------------------------------
# Per-channel min/max
# ----------------------------------------------------------------------------
def per_channel_minmax(x: jax.Array, ch_axis: int):
    ch_axis = ch_axis % x.ndim
    shape = x.shape
    c = int(shape[ch_axis])
    pre = int(math.prod(shape[:ch_axis]))
    post = int(math.prod(shape[ch_axis + 1:]))
    acc_dt = _acc_dtype(x.dtype)

    if c == 0:
        return jnp.zeros((0,), acc_dt), jnp.zeros((0,), acc_dt)
    if pre == 0 or post == 0:
        return (jnp.full((c,), jnp.inf, acc_dt),
                jnp.full((c,), -jnp.inf, acc_dt))

    # Free reshape — the channel axis stays in place, so no HBM transpose.
    x3d = x.reshape(pre, c, post)
    itemsize = jnp.dtype(x.dtype).itemsize

    post_cap = min(_MAX_POST_LANES,
                   max(_LANES,
                       (_TARGET_BLOCK_BYTES // max(c * itemsize, 1))
                       // _LANES * _LANES))
    if post <= post_cap:
        # Small/medium post: take it whole and grow the block along pre so a
        # single DMA is MiB-scale (amortizes the ~0.35us per-step overhead).
        post_tile = post
        n_post = 1
        post_ragged = False
        pre_tile = max(1, min(pre, _MAX_PRE_TILE,
                              _TARGET_BLOCK_BYTES
                              // max(c * post * itemsize, 1)))
    else:
        # Very wide post: tile post (multiple of 128), one pre slab per step.
        post_tile = post_cap
        n_post = _cdiv(post, post_tile)
        post_ragged = (post % post_tile) != 0
        pre_tile = 1

    n_pre_full = pre // pre_tile            # >= 1; ragged pre tail goes to XLA
    pre_tail = pre - n_pre_full * pre_tile
    per_core = _cdiv(n_pre_full, _N_CORES)

    def kernel(x_ref, min_ref, max_ref):
        p = pl.program_id(1)
        t = pl.program_id(2)

        @pl.when((p == 0) & (t == 0))
        def _():
            min_ref[...] = jnp.full(min_ref.shape, jnp.inf, min_ref.dtype)
            max_ref[...] = jnp.full(max_ref.shape, -jnp.inf, max_ref.dtype)

        xt = x_ref[...].astype(acc_dt)      # (pre_tile, c, post_tile)
        if pre_tile > 1:
            # Reduce over the leading (non-layout) dim: elementwise VPU chain.
            m_min = jnp.min(xt, axis=0)     # (c, post_tile)
            m_max = jnp.max(xt, axis=0)
        else:
            m_min = xt[0]
            m_max = xt[0]

        def lane_fold(mn2, mx2):
            # Lane-dense elementwise folds into the resident (c,128) block;
            # cross-lane collapse happens once in the wrapper.
            for j in range(0, post_tile, _LANES):
                w = min(_LANES, post_tile - j)
                min_ref[0, :, :w] = jnp.minimum(min_ref[0, :, :w],
                                                mn2[:, j:j + w])
                max_ref[0, :, :w] = jnp.maximum(max_ref[0, :, :w],
                                                mx2[:, j:j + w])

        if post_ragged:
            is_edge = t == n_post - 1
            @pl.when(is_edge)
            def _():
                lane = t * post_tile + lax.broadcasted_iota(
                    jnp.int32, (c, post_tile), 1)
                valid = lane < post
                lane_fold(jnp.where(valid, m_min, jnp.inf),
                          jnp.where(valid, m_max, -jnp.inf))
            @pl.when(jnp.logical_not(is_edge))
            def _():
                lane_fold(m_min, m_max)
        else:
            lane_fold(m_min, m_max)

    min_out, max_out = pl.pallas_call(
        kernel,
        out_shape=(
            jax.ShapeDtypeStruct((_N_CORES, c, _LANES), acc_dt),
            jax.ShapeDtypeStruct((_N_CORES, c, _LANES), acc_dt),
        ),
        grid_spec=pltpu.PrefetchScalarGridSpec(
            num_scalar_prefetch=0,
            grid=(_N_CORES, per_core, n_post),
            in_specs=[pl.BlockSpec(
                (pre_tile, c, post_tile),
                lambda ci, p, t: (jnp.minimum(ci * per_core + p,
                                              n_pre_full - 1), 0, t))],
            out_specs=(
                pl.BlockSpec((1, c, _LANES), lambda ci, p, t: (ci, 0, 0)),
                pl.BlockSpec((1, c, _LANES), lambda ci, p, t: (ci, 0, 0)),
            ),
        ),
        compiler_params=pltpu.CompilerParams(
            dimension_semantics=(_LEAD_SEM, pltpu.ARBITRARY, pltpu.ARBITRARY),
            vmem_limit_bytes=_VMEM_LIMIT),
    )(x3d)

    # Tiny final combine: per-core partials + lane collapse (+ pre tail).
    mn = jnp.min(min_out, axis=(0, 2))
    mx = jnp.max(max_out, axis=(0, 2))
    if pre_tail:
        tail = x3d[n_pre_full * pre_tile:].astype(acc_dt)
        mn = jnp.minimum(mn, jnp.min(tail, axis=(0, 2)))
        mx = jnp.maximum(mx, jnp.max(tail, axis=(0, 2)))
    return mn, mx


# ----------------------------------------------------------------------------
# Module-equivalent classes (no parameters in __init__, like the PyTorch code)
# ----------------------------------------------------------------------------
class ObserverBase:
    def __init__(self):
        pass

    def forward(self, x, qscheme):
        assert isinstance(qscheme, QScheme)
        return self._observer_impl(x, qscheme)

    __call__ = forward

    def _observer_impl(self, x, qscheme):
        # Mirrors the abstract PyTorch base class (DEBUG-env escape omitted).
        raise NotImplementedError()


class MinMaxObserver(ObserverBase):
    """Canonical concrete observer: returns (min_val, max_val) statistics."""

    def _observer_impl(self, x, qscheme):
        if qscheme.per_channel:
            return per_channel_minmax(x, qscheme.ch_axis)
        return per_tensor_minmax(x)


# ----------------------------------------------------------------------------
# Main
# ----------------------------------------------------------------------------
if __name__ == "__main__":
    key = jax.random.PRNGKey(0)
    x = jax.random.normal(key, (2, 4, 16, 16), dtype=jnp.float32)  # NCHW

    obs = MinMaxObserver()

    # Per-tensor observation.
    mn, mx = obs(x, QScheme(per_channel=False))
    mn, mx = jax.block_until_ready((mn, mx))
    assert jnp.allclose(mn, jnp.min(x)), (mn, jnp.min(x))
    assert jnp.allclose(mx, jnp.max(x)), (mx, jnp.max(x))

    # Per-channel observation over the C axis.
    mn_c, mx_c = obs(x, QScheme(per_channel=True, ch_axis=1))
    mn_c, mx_c = jax.block_until_ready((mn_c, mx_c))
    ref_mn = jnp.min(x, axis=(0, 2, 3))
    ref_mx = jnp.max(x, axis=(0, 2, 3))
    assert jnp.allclose(mn_c, ref_mn), (mn_c, ref_mn)
    assert jnp.allclose(mx_c, ref_mx), (mx_c, ref_mx)

    # Per-channel over a later axis (exercises the non-128-multiple lane fold).
    mn_h, mx_h = obs(x, QScheme(per_channel=True, ch_axis=2))
    mn_h, mx_h = jax.block_until_ready((mn_h, mx_h))
    assert jnp.allclose(mn_h, jnp.min(x, axis=(0, 1, 3)))
    assert jnp.allclose(mx_h, jnp.max(x, axis=(0, 1, 3)))

    # Unaligned per-tensor size (exercises the pad-free prefix + XLA tail).
    y = jax.random.normal(jax.random.PRNGKey(1), (3, 100), dtype=jnp.float32)
    mn_y, mx_y = obs(y, QScheme(per_channel=False))
    mn_y, mx_y = jax.block_until_ready((mn_y, mx_y))
    assert jnp.allclose(mn_y, jnp.min(y)), (mn_y, jnp.min(y))
    assert jnp.allclose(mx_y, jnp.max(y)), (mx_y, jnp.max(y))

    print("KERNEL_OK")
</pallas_src>

<mosaic_0001>
module attributes {stable_mosaic.version = 11 : i64} {
  func.func @kernel(%arg0: i32, %arg1: i32, %arg2: memref<16x128xf32, #tpu.memory_space<vmem>>, %arg3: memref<8x128xf32, #tpu.memory_space<vmem>>, %arg4: memref<8x128xf32, #tpu.memory_space<vmem>>) attributes {dimension_semantics = [#tpu.dimension_semantics<arbitrary>, #tpu.dimension_semantics<arbitrary>], iteration_bounds = array<i64: 1, 1>, scalar_prefetch = 0 : i64, scratch_operands = 0 : i64, tpu.core_type = #tpu.core_type<tc>, window_params = [{transform_indices = @transform_0, window_bounds = array<i64: 16, 128>}, {transform_indices = @transform_1, window_bounds = array<i64: 8, 128>}, {transform_indices = @transform_2, window_bounds = array<i64: 8, 128>}]} {
    %c0_i32 = arith.constant 0 : i32
    %0 = arith.cmpi eq, %arg1, %c0_i32 : i32
    %1 = arith.extui %0 : i1 to i32
    %c0_i32_0 = arith.constant 0 : i32
    %2 = arith.cmpi ne, %1, %c0_i32_0 : i32
    scf.if %2 {
      %cst = arith.constant 0x7F800000 : f32
      %18 = vector.broadcast %cst : f32 to vector<8x128xf32>
      %c0_18 = arith.constant 0 : index
      %c0_19 = arith.constant 0 : index
      %19 = vector.load %arg3[%c0_18, %c0_19] : memref<8x128xf32, #tpu.memory_space<vmem>>, vector<8x128xf32>
      tpu.vector_store %arg3[%c0_18, %c0_19], %18 {strides = array<i32>} : memref<8x128xf32, #tpu.memory_space<vmem>>, vector<8x128xf32>,
      %cst_20 = arith.constant 0xFF800000 : f32
      %20 = vector.broadcast %cst_20 : f32 to vector<8x128xf32>
      %c0_21 = arith.constant 0 : index
      %c0_22 = arith.constant 0 : index
      %21 = vector.load %arg4[%c0_21, %c0_22] : memref<8x128xf32, #tpu.memory_space<vmem>>, vector<8x128xf32>
      tpu.vector_store %arg4[%c0_21, %c0_22], %20 {strides = array<i32>} : memref<8x128xf32, #tpu.memory_space<vmem>>, vector<8x128xf32>,
    } else {
    }
    %c0 = arith.constant 0 : index
    %c0_1 = arith.constant 0 : index
    %3 = vector.load %arg2[%c0, %c0_1] : memref<16x128xf32, #tpu.memory_space<vmem>>, vector<16x128xf32>
    %4 = vector.extract_strided_slice %3 {offsets = [0, 0], sizes = [8, 128], strides = [1, 1]} : vector<16x128xf32> to vector<8x128xf32>
    %c0_2 = arith.constant 0 : index
    %c0_3 = arith.constant 0 : index
    %5 = vector.load %arg3[%c0_2, %c0_3] : memref<8x128xf32, #tpu.memory_space<vmem>>, vector<8x128xf32>
    %6 = arith.minimumf %5, %4 : vector<8x128xf32>
    %c0_4 = arith.constant 0 : index
    %c0_5 = arith.constant 0 : index
    %7 = vector.load %arg3[%c0_4, %c0_5] : memref<8x128xf32, #tpu.memory_space<vmem>>, vector<8x128xf32>
    tpu.vector_store %arg3[%c0_4, %c0_5], %6 {strides = array<i32>} : memref<8x128xf32, #tpu.memory_space<vmem>>, vector<8x128xf32>,
    %c0_6 = arith.constant 0 : index
    %c0_7 = arith.constant 0 : index
    %8 = vector.load %arg4[%c0_6, %c0_7] : memref<8x128xf32, #tpu.memory_space<vmem>>, vector<8x128xf32>
    %9 = arith.maximumf %8, %4 : vector<8x128xf32>
    %c0_8 = arith.constant 0 : index
    %c0_9 = arith.constant 0 : index
    %10 = vector.load %arg4[%c0_8, %c0_9] : memref<8x128xf32, #tpu.memory_space<vmem>>, vector<8x128xf32>
    tpu.vector_store %arg4[%c0_8, %c0_9], %9 {strides = array<i32>} : memref<8x128xf32, #tpu.memory_space<vmem>>, vector<8x128xf32>,
    %11 = vector.extract_strided_slice %3 {offsets = [8, 0], sizes = [8, 128], strides = [1, 1]} : vector<16x128xf32> to vector<8x128xf32>
    %c0_10 = arith.constant 0 : index
    %c0_11 = arith.constant 0 : index
    %12 = vector.load %arg3[%c0_10, %c0_11] : memref<8x128xf32, #tpu.memory_space<vmem>>, vector<8x128xf32>
    %13 = arith.minimumf %12, %11 : vector<8x128xf32>
    %c0_12 = arith.constant 0 : index
    %c0_13 = arith.constant 0 : index
    %14 = vector.load %arg3[%c0_12, %c0_13] : memref<8x128xf32, #tpu.memory_space<vmem>>, vector<8x128xf32>
    tpu.vector_store %arg3[%c0_12, %c0_13], %13 {strides = array<i32>} : memref<8x128xf32, #tpu.memory_space<vmem>>, vector<8x128xf32>,
    %c0_14 = arith.constant 0 : index
    %c0_15 = arith.constant 0 : index
    %15 = vector.load %arg4[%c0_14, %c0_15] : memref<8x128xf32, #tpu.memory_space<vmem>>, vector<8x128xf32>
    %16 = arith.maximumf %15, %11 : vector<8x128xf32>
    %c0_16 = arith.constant 0 : index
    %c0_17 = arith.constant 0 : index
    %17 = vector.load %arg4[%c0_16, %c0_17] : memref<8x128xf32, #tpu.memory_space<vmem>>, vector<8x128xf32>
    tpu.vector_store %arg4[%c0_16, %c0_17], %16 {strides = array<i32>} : memref<8x128xf32, #tpu.memory_space<vmem>>, vector<8x128xf32>,
    return
  }
  func.func @transform_0(%arg0: i32, %arg1: i32) -> (i32, i32) {
    %c1_i32 = arith.constant 1 : i32
    %0 = arith.muli %arg0, %c1_i32 : i32
    %1 = arith.addi %0, %arg1 : i32
    %c0_i32 = arith.constant 0 : i32
    %2 = arith.minsi %1, %c0_i32 : i32
    %c0_i32_0 = arith.constant 0 : i32
    %c0_i32_1 = arith.constant 0 : i32
    return %2, %c0_i32_0 : i32, i32
  }
  func.func @transform_1(%arg0: i32, %arg1: i32) -> (i32, i32) {
    %c0_i32 = arith.constant 0 : i32
    %c0_i32_0 = arith.constant 0 : i32
    return %arg0, %c0_i32 : i32, i32
  }
  func.func @transform_2(%arg0: i32, %arg1: i32) -> (i32, i32) {
    %c0_i32 = arith.constant 0 : i32
    %c0_i32_0 = arith.constant 0 : i32
    return %arg0, %c0_i32 : i32, i32
  }
}

</mosaic_0001>

<llo_original>
// kernel: tpu_custom_call.1
$region0: #{tpu_custom_call.1}
  #allocation0 [shape = 'u32[]', space=smem, size = 0x4, offset = 0x4, fixed_abs, tag = 'smem constant byte address 0x4 - core index']
  #allocation1 [shape = 'u32[72,128]{1,0:T(1,128)}', space=vmem, size = 0x9000, scoped, tag = 'internal scratch']
  %s0 = inlined_call_operand.hbm [shape: f32[16,128], index: 0, kind: input, shape index: {}]
  %s1 = inlined_call_operand.hbm [shape: f32[8,128], index: 1, kind: output, shape index: {0}]
  %s2 = inlined_call_operand.hbm [shape: f32[8,128], index: 2, kind: output, shape index: {1}]
  %3 = xla_tuple %s1, %s2
  %s4 = sld [smem:[#allocation0]]
  $region30: #{tpu_custom_call.1} parent=0
    _
  %s6 = ssub.s32 1, %s4
  %s7 = scalar_select 0, %s6, %s4
  $region1: #{tpu_custom_call.1} parent=0
    #allocation2 [shape = 'u8[8192]{0}', space=vmem, size = 0x2000, scoped, tag = 'input window, operand 0, single buffered']
    #allocation3 [shape = 's32[1]{0}', space=sflag, size = 0x4, scoped, tag = 'scoped memory for tpu_custom_call.1']
    #allocation4 [shape = 's32[1]{0}', space=sflag, size = 0x4, scoped, tag = 'scoped memory for tpu_custom_call.1']
    #allocation5 [shape = 'u8[4096]{0}', space=vmem, size = 0x1000, scoped, tag = 'output window, operand 0, single buffered']
    #allocation6 [shape = 'u8[4096]{0}', space=vmem, size = 0x1000, scoped, tag = 'output window, operand 1, single buffered']
    #allocation7 [shape = 's32[1]{0}', space=sflag, size = 0x4, scoped, tag = 'scoped memory for tpu_custom_call.1']
    %8 = vsyncpa [#allocation3], 0
    %9 = vsyncpa [#allocation4], 0
    %10 = vsyncpa [#allocation7], 0
    // Predicated region
    $region2: #{tpu_custom_call.1} parent=1 // pred_check
      _
    $region3: #{tpu_custom_call.1} parent=1 // pred_check_branch
      %12 = sbr.rel (0) target = $region5
    $region4: #{tpu_custom_call.1} parent=1 // pred_region
      %s13 = sadd.s32 0, 0
      %p14 = scmp.lt.s32.totalorder %s13, 0
      %s15 = scalar_select %p14, %s13, 0
      %s16 = smul.u32 2, %s15
      %18 = vsyncadd [#allocation3], 0
      %s19 = smul.addr %s16, 8
      %s20 = scalar_lea.hbm %s0, %s19
      %s21 = sshll.u32 %s20, 4
      %s22 = int_to_ptr.hbm [resolvable:$true] %s21
      %s23 = sshll.u32 [#allocation2], 4
      %s24 = int_to_ptr.vmem [resolvable:$true] %s23
      %29 = dma.hbm_to_vmem [thread:$0]  %s22, 256, %s24, [#allocation3], 128, 128, 8
    $region5: #{tpu_custom_call.1} parent=1 // pred_fallthru
      _
    // Predicated region
    $region6: #{tpu_custom_call.1} parent=1 // pred_check
      _
    $region7: #{tpu_custom_call.1} parent=1 // pred_check_branch
      %31 = sbr.rel (0) target = $region9
    $region8: #{tpu_custom_call.1} parent=1 // pred_region
      %33 = dma.done [#allocation3], 256
    $region9: #{tpu_custom_call.1} parent=1 // pred_fallthru
      _
    %s34 = sadd.s32 0, 0
    %p35 = scmp.lt.s32.totalorder %s34, 0
    %s36 = scalar_select %p35, %s34, 0
    %s37 = smul.u32 2, %s36
    %p38 = scmp.eq.s32.totalorder 0, 0
    // Predicated region
    $region10: #{tpu_custom_call.1} parent=1 // pred_check
      %p39 = pneg %p38
    $region11: #{tpu_custom_call.1} parent=1 // pred_check_branch
      %41 = sbr.rel (%p39) target = $region13
    $region12: #{tpu_custom_call.1} parent=1 // pred_region
      %42 = vst [vmem:[#allocation5] sm:$0xff] inf
      %43 = vst [vmem:[#allocation6] sm:$0xff] -inf
    $region13: #{tpu_custom_call.1} parent=1 // pred_fallthru
      _
    %v44 = vld [vmem:[#allocation2] sm:$0xff]
    %v45 = vld [vmem:[#allocation2 + $0x8] sm:$0xff]
    %v46 = vld [vmem:[#allocation5] sm:$0xff]
    %v47 = vmin.f32 %v46, %v44
    %48 = vst [vmem:[#allocation5] sm:$0xff] %v47
    %v49 = vld [vmem:[#allocation6] sm:$0xff]
    %v50 = vmax.f32 %v49, %v44
    %51 = vst [vmem:[#allocation6] sm:$0xff] %v50
    %v52 = vld [vmem:[#allocation5] sm:$0xff]
    %v53 = vmin.f32 %v52, %v45
    %54 = vst [vmem:[#allocation5] sm:$0xff] %v53
    %v55 = vld [vmem:[#allocation6] sm:$0xff]
    %v56 = vmax.f32 %v55, %v45
    %57 = vst [vmem:[#allocation6] sm:$0xff] %v56
    // Predicated region
    $region14: #{tpu_custom_call.1} parent=1 // pred_check
      _
    $region15: #{tpu_custom_call.1} parent=1 // pred_check_branch
      %59 = sbr.rel (0) target = $region17
    $region16: #{tpu_custom_call.1} parent=1 // pred_region
      %61 = vsyncadd [#allocation4], 0
      %s63 = sshll.u32 [#allocation5], 4
      %s64 = int_to_ptr.vmem [resolvable:$true] %s63
      %s65 = sshll.u32 %s1, 4
      %s66 = int_to_ptr.hbm [resolvable:$true] %s65
      %68 = dma.vmem_to_hbm [thread:$0]  %s64, 128, %s66, [#allocation4]
    $region17: #{tpu_custom_call.1} parent=1 // pred_fallthru
      _
    // Predicated region
    $region18: #{tpu_custom_call.1} parent=1 // pred_check
      _
    $region19: #{tpu_custom_call.1} parent=1 // pred_check_branch
      %70 = sbr.rel (0) target = $region21
    $region20: #{tpu_custom_call.1} parent=1 // pred_region
      %72 = vsyncadd [#allocation7], 0
      %s74 = sshll.u32 [#allocation6], 4
      %s75 = int_to_ptr.vmem [resolvable:$true] %s74
      %s76 = sshll.u32 %s2, 4
      %s77 = int_to_ptr.hbm [resolvable:$true] %s76
      %79 = dma.vmem_to_hbm [thread:$0]  %s75, 128, %s77, [#allocation7]
    $region21: #{tpu_custom_call.1} parent=1 // pred_fallthru
      _
    // Predicated region
    $region22: #{tpu_custom_call.1} parent=1 // pred_check
      _
    $region23: #{tpu_custom_call.1} parent=1 // pred_check_branch
      %81 = sbr.rel (0) target = $region25
    $region24: #{tpu_custom_call.1} parent=1 // pred_region
      %83 = dma.done [#allocation4], 128
    $region25: #{tpu_custom_call.1} parent=1 // pred_fallthru
      _
    // Predicated region
    $region26: #{tpu_custom_call.1} parent=1 // pred_check
      _
    $region27: #{tpu_custom_call.1} parent=1 // pred_check_branch
      %85 = sbr.rel (0) target = $region29
    $region28: #{tpu_custom_call.1} parent=1 // pred_region
      %87 = dma.done [#allocation7], 128
    $region29: #{tpu_custom_call.1} parent=1 // pred_fallthru
      _
    %88 = vsyncpa [#allocation3], 1
    %89 = vsyncpa [#allocation4], 1
    %90 = vsyncpa [#allocation7], 1

</llo_original>
